<compile_context>
chip_gen: v5e
topology: v5e:2x2
jax: 0.10.0
libtpu: 0.0.40
codegen_flags: <defaults>
</compile_context>

<pallas_src>
import functools

import jax
import jax.numpy as jnp
from jax.experimental import pallas as pl
from jax.experimental.pallas import tpu as pltpu


def _cv1_kernel(x_ref, w1_ref, b1_ref, o_ref):
    """1x1 conv + (folded) BN + SiLU for one image row; writes a W-zero-padded row.

    x_ref : (1, 1, C1, W)    input row (channels x width)
    w1_ref: (C_, C1)         BN-scale-folded 1x1 conv weight
    b1_ref: (C_, 1)          BN bias
    o_ref : (1, 1, C_, W+2)  output row, zero column on each side
    """
    W = x_ref.shape[-1]
    x_row = x_ref[0, 0]                                                  # (C1, W)
    acc = jnp.dot(w1_ref[...], x_row, preferred_element_type=jnp.float32)  # (C_, W)
    y = acc + b1_ref[...]
    y = y * jax.nn.sigmoid(y)                                            # SiLU
    o_ref[...] = jnp.zeros_like(o_ref)                                   # zero pad cols
    o_ref[0, 0, :, 1:W + 1] = y.astype(o_ref.dtype)


def _cv2_kernel(y0_ref, y1_ref, y2_ref, w2_ref, b2_ref, *rest, add):
    """3x3 conv (pad=1) + (folded) BN + SiLU (+ residual) for one output row.

    y{0,1,2}_ref: (1, 1, C_, W+2)  stencil rows h-1, h, h+1 (clamped; masked here)
    w2_ref      : (3, 3, C2, C_)   BN-scale-folded 3x3 weight, tap-major
    b2_ref      : (C2, 1)          BN bias
    rest        : (x_ref, o_ref) if add else (o_ref,)
    """
    if add:
        x_ref, o_ref = rest
    else:
        (o_ref,) = rest
    C2 = o_ref.shape[2]
    W = o_ref.shape[3]

    h = pl.program_id(1)
    H = pl.num_programs(1)
    top = (h >= 1).astype(jnp.float32)        # row h-1 exists?
    bot = (h <= H - 2).astype(jnp.float32)    # row h+1 exists?

    rows = (y0_ref[0, 0] * top, y1_ref[0, 0], y2_ref[0, 0] * bot)  # each (C_, W+2)

    acc = jnp.zeros((C2, W), jnp.float32)
    for dy in range(3):
        row = rows[dy]
        for dx in range(3):
            acc = acc + jnp.dot(w2_ref[dy, dx], row[:, dx:dx + W],
                                preferred_element_type=jnp.float32)

    y = acc + b2_ref[...]
    y = y * jax.nn.sigmoid(y)                 # SiLU
    if add:
        y = y + x_ref[0, 0].astype(jnp.float32)
    o_ref[0, 0] = y.astype(o_ref.dtype)


def bottleneck_forward(x, w1, g1, be1, m1, v1, w2, g2, be2, m2, v2,
                       shortcut=True, eps=1e-5):
    """x: (B, C1, H, W) f32 NCHW.  w1: (C_, C1, 1, 1).  w2: (C2, C_, 3, 3)."""
    B, C1, H, W = x.shape
    C_ = w1.shape[0]
    C2 = w2.shape[0]
    add = bool(shortcut) and (C1 == C2)

    # Fold BN (eval running stats) scale into the conv weights; keep bias for epilogue.
    s1 = g1 / jnp.sqrt(v1 + eps)
    b1 = (be1 - m1 * s1).reshape(C_, 1)
    w1m = w1.reshape(C_, C1) * s1[:, None]                          # (C_, C1)

    s2 = g2 / jnp.sqrt(v2 + eps)
    b2 = (be2 - m2 * s2).reshape(C2, 1)
    w2m = jnp.transpose(w2 * s2[:, None, None, None], (2, 3, 0, 1))  # (3, 3, C2, C_)

    # NCHW -> (B, H, C, W): rows on a leading dim, width stays on the lane axis.
    xt = jnp.transpose(x, (0, 2, 1, 3))                              # (B, H, C1, W)

    # ---- kernel 1: cv1 (1x1 conv + BN + SiLU), emits W-zero-padded rows ----
    y1p = pl.pallas_call(
        _cv1_kernel,
        out_shape=jax.ShapeDtypeStruct((B, H, C_, W + 2), jnp.float32),
        grid=(B, H),
        in_specs=[
            pl.BlockSpec((1, 1, C1, W), lambda b, h: (b, h, 0, 0)),
            pl.BlockSpec((C_, C1), lambda b, h: (0, 0)),
            pl.BlockSpec((C_, 1), lambda b, h: (0, 0)),
        ],
        out_specs=pl.BlockSpec((1, 1, C_, W + 2), lambda b, h: (b, h, 0, 0)),
        compiler_params=pltpu.CompilerParams(
            dimension_semantics=("parallel", "parallel")),
    )(xt, w1m, b1)

    # ---- kernel 2: cv2 (3x3 conv + BN + SiLU) + optional residual ----
    def row_map(dy):
        return lambda b, h: (b, jnp.clip(h + dy - 1, 0, H - 1), 0, 0)

    in_specs = [
        pl.BlockSpec((1, 1, C_, W + 2), row_map(0)),
        pl.BlockSpec((1, 1, C_, W + 2), row_map(1)),
        pl.BlockSpec((1, 1, C_, W + 2), row_map(2)),
        pl.BlockSpec((3, 3, C2, C_), lambda b, h: (0, 0, 0, 0)),
        pl.BlockSpec((C2, 1), lambda b, h: (0, 0)),
    ]
    args = [y1p, y1p, y1p, w2m, b2]
    if add:
        in_specs.append(pl.BlockSpec((1, 1, C1, W), lambda b, h: (b, h, 0, 0)))
        args.append(xt)

    out_t = pl.pallas_call(
        functools.partial(_cv2_kernel, add=add),
        out_shape=jax.ShapeDtypeStruct((B, H, C2, W), x.dtype),
        grid=(B, H),
        in_specs=in_specs,
        out_specs=pl.BlockSpec((1, 1, C2, W), lambda b, h: (b, h, 0, 0)),
        compiler_params=pltpu.CompilerParams(
            dimension_semantics=("parallel", "parallel")),
    )(*args)

    return jnp.transpose(out_t, (0, 2, 1, 3))                        # back to NCHW


def bottleneck_reference(x, w1, g1, be1, m1, v1, w2, g2, be2, m2, v2,
                         shortcut=True, eps=1e-5):
    """Pure-JAX reference (lax conv) for a sanity check."""
    def conv_bn_silu(z, w, g, be, m, v, pad):
        y = jax.lax.conv_general_dilated(
            z, w, window_strides=(1, 1), padding=[(pad, pad), (pad, pad)],
            dimension_numbers=("NCHW", "OIHW", "NCHW"))
        s = (g / jnp.sqrt(v + eps)).reshape(1, -1, 1, 1)
        b = (be - m * g / jnp.sqrt(v + eps)).reshape(1, -1, 1, 1)
        y = y * s + b
        return y * jax.nn.sigmoid(y)

    y = conv_bn_silu(x, w1, g1, be1, m1, v1, 0)
    y = conv_bn_silu(y, w2, g2, be2, m2, v2, 1)
    return x + y if (shortcut and x.shape[1] == w2.shape[0]) else y


if __name__ == "__main__":
    key = jax.random.PRNGKey(0)
    B, C1, C2, H, W = 2, 8, 8, 16, 16
    e = 0.5
    C_ = int(C2 * e)

    ks = jax.random.split(key, 12)
    x = jax.random.normal(ks[0], (B, C1, H, W), dtype=jnp.float32)

    # cv1: Conv(c1, c_, 1, 1)
    w1 = 0.2 * jax.random.normal(ks[1], (C_, C1, 1, 1), dtype=jnp.float32)
    g1 = 1.0 + 0.1 * jax.random.normal(ks[2], (C_,), dtype=jnp.float32)
    be1 = 0.1 * jax.random.normal(ks[3], (C_,), dtype=jnp.float32)
    m1 = 0.05 * jax.random.normal(ks[4], (C_,), dtype=jnp.float32)
    v1 = jnp.abs(jax.random.normal(ks[5], (C_,), dtype=jnp.float32)) + 0.5

    # cv2: Conv(c_, c2, 3, 1)
    w2 = 0.1 * jax.random.normal(ks[6], (C2, C_, 3, 3), dtype=jnp.float32)
    g2 = 1.0 + 0.1 * jax.random.normal(ks[7], (C2,), dtype=jnp.float32)
    be2 = 0.1 * jax.random.normal(ks[8], (C2,), dtype=jnp.float32)
    m2 = 0.05 * jax.random.normal(ks[9], (C2,), dtype=jnp.float32)
    v2 = jnp.abs(jax.random.normal(ks[10], (C2,), dtype=jnp.float32)) + 0.5

    out = bottleneck_forward(x, w1, g1, be1, m1, v1, w2, g2, be2, m2, v2,
                             shortcut=True)
    out = jax.block_until_ready(out)

    ref = bottleneck_reference(x, w1, g1, be1, m1, v1, w2, g2, be2, m2, v2,
                               shortcut=True)
    assert out.shape == (B, C2, H, W), out.shape
    assert jnp.allclose(out, ref, atol=1e-4, rtol=1e-4), (
        float(jnp.max(jnp.abs(out - ref))))

    print("KERNEL_OK")
</pallas_src>

<mosaic_0001>
module attributes {stable_mosaic.version = 11 : i64} {
  func.func @_cv1_kernel(%arg0: i32, %arg1: i32, %arg2: memref<1x1x8x16xf32, #tpu.memory_space<vmem>>, %arg3: memref<4x8xf32, #tpu.memory_space<vmem>>, %arg4: memref<4x1xf32, #tpu.memory_space<vmem>>, %arg5: memref<1x1x4x18xf32, #tpu.memory_space<vmem>>) attributes {dimension_semantics = [#tpu.dimension_semantics<parallel>, #tpu.dimension_semantics<parallel>], iteration_bounds = array<i64: 2, 16>, scalar_prefetch = 0 : i64, scratch_operands = 0 : i64, tpu.core_type = #tpu.core_type<tc>, window_params = [{transform_indices = @transform_0, window_bounds = array<i64: 1, 1, 8, 16>}, {pipeline_mode = #tpu.pipeline_mode<synchronous>, transform_indices = @transform_1, window_bounds = array<i64: 4, 8>}, {pipeline_mode = #tpu.pipeline_mode<synchronous>, transform_indices = @transform_2, window_bounds = array<i64: 4, 1>}, {transform_indices = @transform_3, window_bounds = array<i64: 1, 1, 4, 18>}]} {
    %c0 = arith.constant 0 : index
    %c0_0 = arith.constant 0 : index
    %c0_1 = arith.constant 0 : index
    %c0_2 = arith.constant 0 : index
    %0 = vector.load %arg2[%c0, %c0_0, %c0_1, %c0_2] : memref<1x1x8x16xf32, #tpu.memory_space<vmem>>, vector<1x1x8x16xf32>
    %1 = vector.shape_cast %0 : vector<1x1x8x16xf32> to vector<8x16xf32>
    %c0_3 = arith.constant 0 : index
    %c0_4 = arith.constant 0 : index
    %2 = vector.load %arg3[%c0_3, %c0_4] : memref<4x8xf32, #tpu.memory_space<vmem>>, vector<4x8xf32>
    %cst = arith.constant dense<0.000000e+00> : vector<4x16xf32>
    %3 = tpu.matmul %2, %1, %cst {dimension_numbers = #tpu.dot_dimension_numbers<[1], [0], [0], [1], [0, 0, 1, 1], [], []>} : vector<4x8xf32>, vector<8x16xf32>, vector<4x16xf32> -> vector<4x16xf32>
    %c0_5 = arith.constant 0 : index
    %c0_6 = arith.constant 0 : index
    %4 = vector.load %arg4[%c0_5, %c0_6] : memref<4x1xf32, #tpu.memory_space<vmem>>, vector<4x1xf32>
    %5 = vector.broadcast %4 : vector<4x1xf32> to vector<4x16xf32>
    %6 = arith.addf %3, %5 : vector<4x16xf32>
    %7 = arith.negf %6 : vector<4x16xf32>
    %8 = math.exp %7 : vector<4x16xf32>
    %cst_7 = arith.constant 1.000000e+00 : f32
    %9 = vector.broadcast %cst_7 : f32 to vector<4x16xf32>
    %10 = arith.addf %9, %8 : vector<4x16xf32>
    %11 = arith.divf %9, %10 : vector<4x16xf32>
    %12 = arith.mulf %6, %11 : vector<4x16xf32>
    %cst_8 = arith.constant 0.000000e+00 : f32
    %13 = vector.broadcast %cst_8 : f32 to vector<1x1x4x18xf32>
    %c0_9 = arith.constant 0 : index
    %c0_10 = arith.constant 0 : index
    %c0_11 = arith.constant 0 : index
    %c0_12 = arith.constant 0 : index
    %14 = vector.load %arg5[%c0_9, %c0_10, %c0_11, %c0_12] : memref<1x1x4x18xf32, #tpu.memory_space<vmem>>, vector<1x1x4x18xf32>
    tpu.vector_store %arg5[%c0_9, %c0_10, %c0_11, %c0_12], %13 {strides = array<i32>} : memref<1x1x4x18xf32, #tpu.memory_space<vmem>>, vector<1x1x4x18xf32>,
    %c0_13 = arith.constant 0 : index
    %c0_14 = arith.constant 0 : index
    %c0_15 = arith.constant 0 : index
    %c1 = arith.constant 1 : index
    %15 = vector.load %arg5[%c0_13, %c0_14, %c0_15, %c1] : memref<1x1x4x18xf32, #tpu.memory_space<vmem>>, vector<1x1x4x16xf32>
    %16 = vector.shape_cast %15 : vector<1x1x4x16xf32> to vector<4x16xf32>
    %17 = vector.shape_cast %12 : vector<4x16xf32> to vector<1x1x4x16xf32>
    tpu.vector_store %arg5[%c0_13, %c0_14, %c0_15, %c1], %17 {strides = array<i32>} : memref<1x1x4x18xf32, #tpu.memory_space<vmem>>, vector<1x1x4x16xf32>,
    return
  }
  func.func @transform_0(%arg0: i32, %arg1: i32) -> (i32, i32, i32, i32) {
    %c0_i32 = arith.constant 0 : i32
    %c0_i32_0 = arith.constant 0 : i32
    %c0_i32_1 = arith.constant 0 : i32
    return %arg0, %arg1, %c0_i32, %c0_i32_0 : i32, i32, i32, i32
  }
  func.func @transform_1(%arg0: i32, %arg1: i32) -> (i32, i32) {
    %c0_i32 = arith.constant 0 : i32
    %c0_i32_0 = arith.constant 0 : i32
    %c0_i32_1 = arith.constant 0 : i32
    return %c0_i32, %c0_i32_0 : i32, i32
  }
  func.func @transform_2(%arg0: i32, %arg1: i32) -> (i32, i32) {
    %c0_i32 = arith.constant 0 : i32
    %c0_i32_0 = arith.constant 0 : i32
    %c0_i32_1 = arith.constant 0 : i32
    return %c0_i32, %c0_i32_0 : i32, i32
  }
  func.func @transform_3(%arg0: i32, %arg1: i32) -> (i32, i32, i32, i32) {
    %c0_i32 = arith.constant 0 : i32
    %c0_i32_0 = arith.constant 0 : i32
    %c0_i32_1 = arith.constant 0 : i32
    return %arg0, %arg1, %c0_i32, %c0_i32_0 : i32, i32, i32, i32
  }
}

</mosaic_0001>

<llo_original>
// kernel: tpu_custom_call.1
$region0: #{tpu_custom_call.1}
  #allocation0 [shape = 'u32[]', space=smem, size = 0x4, offset = 0x4, fixed_abs, tag = 'smem constant byte address 0x4 - core index']
  #allocation1 [shape = 'u32[72,128]{1,0:T(1,128)}', space=vmem, size = 0x9000, scoped, tag = 'internal scratch']
  %s0 = inlined_call_operand.hbm [shape: f32[2,16,8,16], index: 0, kind: input, shape index: {}]
  %s1 = inlined_call_operand.vmem [shape: f32[4,8], index: 1, kind: input, shape index: {}]
  %s2 = inlined_call_operand.vmem [shape: f32[4,1], index: 2, kind: input, shape index: {}]
  %s3 = inlined_call_operand.hbm [shape: f32[2,16,4,18], index: 3, kind: output, shape index: {}]
  %s4 = sld [smem:[#allocation0]]
  $region49: #{tpu_custom_call.1} parent=0
    _
  %s6 = ssub.s32 1, %s4
  %s7 = scalar_select 0, %s6, %s4
  $region1: #{tpu_custom_call.1} parent=0
    #allocation2 [shape = 'u8[8192]{0}', space=vmem, size = 0x2000, scoped, tag = 'input window, operand 0']
    #allocation3 [shape = 's32[2]{0}', space=sflag, size = 0x8, scoped, tag = 'scoped memory for tpu_custom_call.1']
    #allocation4 [shape = 's32[2]{0}', space=sflag, size = 0x8, scoped, tag = 'scoped memory for tpu_custom_call.1']
    #allocation5 [shape = 'u8[4096]{0}', space=vmem, size = 0x1000, scoped, tag = 'output window, operand 0']
    %8 = vsyncpa [#allocation3], 0
    %s9 = scalar_lea.sflag [#allocation3], 1
    %10 = vsyncpa %s9, 0
    %11 = vsyncpa [#allocation4], 0
    %s12 = scalar_lea.sflag [#allocation4], 1
    %13 = vsyncpa %s12, 0
    loop: start=0, step=1, limit=34
    $region2: #{tpu_custom_call.1} parent=1 // loop_pre_header
      _
    $region3: #{tpu_custom_call.1} parent=1 // loop_header
      %s15 = sphi 0, %s19
      %p16 = scmp.ge.s32.totalorder %s15, 34
      %s22 = sphi 0, %s34
      %s23 = sphi 0, %s30
      %s24 = sphi 0, %s22
      %s25 = sphi 0, %s23
      %s26 = sphi 0, %s24
      %s27 = sphi 0, %s25
      %s39 = sphi 0, %s41
      %s42 = sphi 0, %s39
      %s43 = sphi 0, %s42
      %s59 = sphi 0, %s43
      %s63 = sphi 0, %s63
      %s65 = sphi 0, %s63
      %s66 = sphi 0, %s65
      %s80 = sphi 0, %s66
      %s84 = sphi 0, %s84
      %s86 = sphi 0, %s84
      %s87 = sphi 0, %s86
      %s101 = sphi 0, %s87
      %s109 = sphi 0, %s111
      %s112 = sphi 0, %s109
      %s113 = sphi 0, %s112
      %s129 = sphi 0, %s113
    $region4: #{tpu_custom_call.1} parent=1 // loop_header_branch
      %18 = sbr.rel (%p16) target = $region8
    $region5: #{tpu_custom_call.1} parent=1 // loop_body
      %s20 = ssub.s32 %s15, 1
      %s21 = ssub.s32 %s15, 2
      %s28 = sadd.s32 1, %s23
      %p29 = scmp.ge.s32.totalorder %s28, 16
      %s30 = scalar_select %p29, 0, %s28
      %s31 = sadd.s32 1, %s22
      %s32 = scalar_select %p29, %s31, %s22
      %p33 = scmp.ge.s32.totalorder %s32, 2
      %s34 = scalar_select %p33, 0, %s32
      %s35 = ssub.s32 %s22, %s34
      %s36 = ssub.s32 %s23, %s30
      %s37 = sor.u32 %s35, %s36
      %p38 = scmp.eq.s32.totalorder %s37, 0
      %s40 = sadd.s32 %s39, 1
      %s41 = scalar_select %p38, %s39, %s40
      %p44 = pneg %p38
      %p45 = scmp.eq.s32.totalorder %s15, 31
      %p46 = por %p44, %p45
      %p47 = scmp.ne.s32.totalorder %s39, %s42
      %p48 = scmp.eq.s32.totalorder %s15, 0
      %p49 = por %p47, %p48
      %p50 = scmp.ne.s32.totalorder %s39, %s42
      %p51 = scmp.eq.s32.totalorder %s20, 31
      %p52 = por %p50, %p51
      %p53 = scmp.ne.s32.totalorder %s42, %s43
      %p54 = scmp.eq.s32.totalorder %s20, 0
      %p55 = por %p53, %p54
      %p56 = scmp.ne.s32.totalorder %s42, %s43
      %p57 = scmp.eq.s32.totalorder %s21, 31
      %p58 = por %p56, %p57
      %p60 = scmp.ne.s32.totalorder %s43, %s59
      %p61 = scmp.eq.s32.totalorder %s21, 0
      %p62 = por %p60, %p61
      %s64 = sadd.s32 %s63, 1
      %p67 = scmp.eq.s32.totalorder %s15, 31
      %p68 = scmp.ne.s32.totalorder %s63, %s65
      %p69 = scmp.eq.s32.totalorder %s15, 0
      %p70 = por %p68, %p69
      %p71 = scmp.ne.s32.totalorder %s63, %s65
      %p72 = scmp.eq.s32.totalorder %s20, 31
      %p73 = por %p71, %p72
      %p74 = scmp.ne.s32.totalorder %s65, %s66
      %p75 = scmp.eq.s32.totalorder %s20, 0
      %p76 = por %p74, %p75
      %p77 = scmp.ne.s32.totalorder %s65, %s66
      %p78 = scmp.eq.s32.totalorder %s21, 31
      %p79 = por %p77, %p78
      %p81 = scmp.ne.s32.totalorder %s66, %s80
      %p82 = scmp.eq.s32.totalorder %s21, 0
      %p83 = por %p81, %p82
      %s85 = sadd.s32 %s84, 1
      %p88 = scmp.eq.s32.totalorder %s15, 31
      %p89 = scmp.ne.s32.totalorder %s84, %s86
      %p90 = scmp.eq.s32.totalorder %s15, 0
      %p91 = por %p89, %p90
      %p92 = scmp.ne.s32.totalorder %s84, %s86
      %p93 = scmp.eq.s32.totalorder %s20, 31
      %p94 = por %p92, %p93
      %p95 = scmp.ne.s32.totalorder %s86, %s87
      %p96 = scmp.eq.s32.totalorder %s20, 0
      %p97 = por %p95, %p96
      %p98 = scmp.ne.s32.totalorder %s86, %s87
      %p99 = scmp.eq.s32.totalorder %s21, 31
      %p100 = por %p98, %p99
      %p102 = scmp.ne.s32.totalorder %s87, %s101
      %p103 = scmp.eq.s32.totalorder %s21, 0
      %p104 = por %p102, %p103
      %s105 = ssub.s32 %s22, %s34
      %s106 = ssub.s32 %s23, %s30
      %s107 = sor.u32 %s105, %s106
      %p108 = scmp.eq.s32.totalorder %s107, 0
      %s110 = sadd.s32 %s109, 1
      %s111 = scalar_select %p108, %s109, %s110
      %p114 = pneg %p108
      %p115 = scmp.eq.s32.totalorder %s15, 31
      %p116 = por %p114, %p115
      %p117 = scmp.ne.s32.totalorder %s109, %s112
      %p118 = scmp.eq.s32.totalorder %s15, 0
      %p119 = por %p117, %p118
      %p120 = scmp.ne.s32.totalorder %s109, %s112
      %p121 = scmp.eq.s32.totalorder %s20, 31
      %p122 = por %p120, %p121
      %p123 = scmp.ne.s32.totalorder %s112, %s113
      %p124 = scmp.eq.s32.totalorder %s20, 0
      %p125 = por %p123, %p124
      %p126 = scmp.ne.s32.totalorder %s112, %s113
      %p127 = scmp.eq.s32.totalorder %s21, 31
      %p128 = por %p126, %p127
      %p130 = scmp.ne.s32.totalorder %s113, %s129
      %p131 = scmp.eq.s32.totalorder %s21, 0
      %p132 = por %p130, %p131
      %p133 = scmp.le.s32.totalorder 1, %s15
      %p134 = scmp.lt.s32.totalorder %s15, 33
      %p135 = pnand %p133, %p134
      %p136 = pneg %p135
      // Predicated region
      $region9: #{tpu_custom_call.1} parent=5 // pred_check
        _
      $region10: #{tpu_custom_call.1} parent=5 // pred_check_branch
        %138 = sbr.rel (%p135) target = $region12
      $region11: #{tpu_custom_call.1} parent=5 // pred_region
        %s139 = ssub.s32 %s15, 1
        // Predicated region
        $region13: #{tpu_custom_call.1} parent=11 // pred_check
          %p140 = pneg %p76
        $region14: #{tpu_custom_call.1} parent=11 // pred_check_branch
          %142 = sbr.rel (%p140) target = $region16
        $region15: #{tpu_custom_call.1} parent=11 // pred_region
          _
        $region16: #{tpu_custom_call.1} parent=11 // pred_fallthru
          _
        // Predicated region
        $region17: #{tpu_custom_call.1} parent=11 // pred_check
          %p143 = pneg %p97
        $region18: #{tpu_custom_call.1} parent=11 // pred_check_branch
          %145 = sbr.rel (%p143) target = $region20
        $region19: #{tpu_custom_call.1} parent=11 // pred_region
          _
        $region20: #{tpu_custom_call.1} parent=11 // pred_fallthru
          _
      $region12: #{tpu_custom_call.1} parent=5 // pred_fallthru
        _
      %p146 = scmp.lt.s32.totalorder %s15, 32
      // Predicated region
      $region21: #{tpu_custom_call.1} parent=5 // pred_check
        %p147 = pneg %p146
      $region22: #{tpu_custom_call.1} parent=5 // pred_check_branch
        %149 = sbr.rel (%p147) target = $region24
      $region23: #{tpu_custom_call.1} parent=5 // pred_region
        // Predicated region
        $region25: #{tpu_custom_call.1} parent=23 // pred_check
          %p150 = pneg %p49
        $region26: #{tpu_custom_call.1} parent=23 // pred_check_branch
          %152 = sbr.rel (%p150) target = $region28
        $region27: #{tpu_custom_call.1} parent=23 // pred_region
          %s153 = sand.u32 %s39, 1
          %s154 = scalar_lea.sflag [#allocation3], %s153
          %s155 = sand.u32 %s39, 1
          %s156 = smul.addr %s155, 8
          %s157 = scalar_lea.vmem [#allocation2], %s156
          %159 = vsyncadd %s154, 0
          %s160 = smul.addr %s22, 16
          %s161 = sadd.s32 %s23, %s160
          %s162 = smul.addr %s161, 8
          %s163 = scalar_lea.hbm %s0, %s162
          %s165 = sshll.u32 %s163, 4
          %s166 = int_to_ptr.hbm [resolvable:$true] %s165
          %s167 = sshll.u32 %s157, 4
          %s168 = int_to_ptr.vmem [resolvable:$true] %s167
          %170 = dma.hbm_to_vmem [thread:$0]  %s166, 128, %s168, %s154
        $region28: #{tpu_custom_call.1} parent=23 // pred_fallthru
          _
      $region24: #{tpu_custom_call.1} parent=5 // pred_fallthru
        _
      %p171 = scmp.le.s32.totalorder 1, %s15
      %p172 = scmp.lt.s32.totalorder %s15, 33
      %p173 = pnand %p171, %p172
      %p174 = pneg %p173
      // Predicated region
      $region29: #{tpu_custom_call.1} parent=5 // pred_check
        _
      $region30: #{tpu_custom_call.1} parent=5 // pred_check_branch
        %176 = sbr.rel (%p173) target = $region32
      $region31: #{tpu_custom_call.1} parent=5 // pred_region
        %s177 = ssub.s32 %s15, 1
        %s178 = sand.u32 %s42, 1
        %s179 = scalar_lea.sflag [#allocation3], %s178
        %s180 = sand.u32 %s42, 1
        %s181 = smul.addr %s180, 8
        %s182 = scalar_lea.vmem [#allocation2], %s181
        // Predicated region
        $region33: #{tpu_custom_call.1} parent=31 // pred_check
          %p183 = pneg %p55
        $region34: #{tpu_custom_call.1} parent=31 // pred_check_branch
          %185 = sbr.rel (%p183) target = $region36
        $region35: #{tpu_custom_call.1} parent=31 // pred_region
          %187 = dma.done %s179, 128
        $region36: #{tpu_custom_call.1} parent=31 // pred_fallthru
          _
        %s188 = sand.u32 %s42, 1
        %s189 = scalar_lea.sflag [#allocation3], %s188
        %s190 = sand.u32 %s42, 1
        %s191 = smul.addr %s190, 8
        %s192 = scalar_lea.vmem [#allocation2], %s191
        %p193 = pneg %p55
        %p194 = pneg %p52
        %p195 = pneg %p76
        %p196 = pneg %p73
        %p197 = pneg %p97
        %p198 = pneg %p94
        %p199 = pneg %p125
        %p200 = pneg %p122
        %s201 = sand.u32 %s112, 1
        %s202 = scalar_lea.sflag [#allocation4], %s201
        %s203 = sand.u32 %s112, 1
        %s204 = smul.addr %s203, 4
        %s205 = scalar_lea.vmem [#allocation5], %s204
        %v206 = vld [vmem:[%s182] sm:$0xff]
        %v207 = vld [vmem:[%s1] sm:$0xf]
        %v208 = vld [vmem:[%s2] sm:$0xf]
        %210 = vset.pattern.permute.xlu0 0
        %211 = vperm.xlu0 %210, %v208
        %v212 = vpop.permute.xlu0 %211
        %vm214 = vcmask 64512
        %v216 = vsel %vm214, %v207, 0
        %218 = vmatpush.msra.mxu0 0.0
        %219 = vmatpush.msra.mxu0 0.0
        %220 = vmatpush.msra.mxu0 0.0
        %221 = vmatpush.msra.mxu0 0.0
        %222 = vmatpush.msra.mxu0 0.0
        %223 = vmatpush.msra.mxu0 0.0
        %224 = vmatpush.msra.mxu0 0.0
        %225 = vmatpush.msra.mxu0 0.0
        %226 = vmatpush.msra.mxu0 0.0
        %227 = vmatpush.msra.mxu0 0.0
        %228 = vmatpush.msra.mxu0 0.0
        %229 = vmatpush.msra.mxu0 0.0
        %230 = vmatpush.msra.mxu0 0.0
        %231 = vmatpush.msra.mxu0 0.0
        %232 = vmatpush.msra.mxu0 0.0
        %233 = vmatpush.msra.mxu0 %v206
        %234 = vmatmul.f32.gmra.mxu0 %v216
        %v235 = vpop.f32.mrf.mxu0
        %v236 = vadd.f32 %v212, %v235
        %237 = vdwg.mxu0
        %v238 = vxor.u32 %v236, 2147483648
        %v239 = vmul.f32 %v238, 1.442695
        %v240 = vpow.pop %v239
        %v241 = vadd.f32 %v240, 1.0
        %v242 = vrcp.pop %v241
        %v243 = vmul.f32 %v241, %v242
        %v244 = vsub.f32 1.0, %v243
        %v245 = vmul.f32 %v242, %v244
        %v246 = vadd.f32 %v242, %v245
        %vm247 = vweird.f32 %v241
        %vm248 = vweird.f32 %v242
        %vm249 = vmor %vm247, %vm248
        %v250 = vsel %vm249, %v242, %v246
        %v251 = vand.u32 2147483647, %v241
        %vm252 = vcmp.eq.f32.partialorder %v251, 8.507059e+37
        %v253 = vand.u32 %v241, 2147483648
        %v254 = vor.u32 1.1754944e-38, %v253
        %v255 = vsel %vm252, %v254, %v250
        %v256 = vmul.f32 1.0, %v255
        %v257 = vmul.f32 %v236, %v256
        %vm258 = vcmask 142336
        %259 = vst.msk [vmem:[%s205] sm:$0xf] %vm258, 0.0
        %261 = vrot.lane.b32.xlu0 %v257, 1
        %v262 = vpop.permute.xlu0 %261
        %vm264 = vcmask 134152
        %265 = vst.msk [vmem:[%s205] sm:$0xf] %vm264, %v262
        %s266 = sand.u32 %s112, 1
        %s267 = scalar_lea.sflag [#allocation4], %s266
        %s268 = sand.u32 %s112, 1
        %s269 = smul.addr %s268, 4
        %s270 = scalar_lea.vmem [#allocation5], %s269
        // Predicated region
        $region37: #{tpu_custom_call.1} parent=31 // pred_check
          %p271 = pneg %p122
        $region38: #{tpu_custom_call.1} parent=31 // pred_check_branch
          %273 = sbr.rel (%p271) target = $region40
        $region39: #{tpu_custom_call.1} parent=31 // pred_region
          %275 = vsyncadd %s267, 0
          %s276 = smul.addr %s24, 16
          %s277 = sadd.s32 %s25, %s276
          %s278 = smul.addr %s277, 4
          %s279 = scalar_lea.hbm %s3, %s278
          %s281 = sshll.u32 %s270, 4
          %s282 = int_to_ptr.vmem [resolvable:$true] %s281
          %s283 = sshll.u32 %s279, 4
          %s284 = int_to_ptr.hbm [resolvable:$true] %s283
          %286 = dma.vmem_to_hbm [thread:$0]  %s282, 64, %s284, %s267
        $region40: #{tpu_custom_call.1} parent=31 // pred_fallthru
          _
      $region32: #{tpu_custom_call.1} parent=5 // pred_fallthru
        _
      %p287 = scmp.le.s32.totalorder 2, %s15
      // Predicated region
      $region41: #{tpu_custom_call.1} parent=5 // pred_check
        %p288 = pneg %p287
      $region42: #{tpu_custom_call.1} parent=5 // pred_check_branch
        %290 = sbr.rel (%p288) target = $region44
      $region43: #{tpu_custom_call.1} parent=5 // pred_region
        %s291 = ssub.s32 %s15, 2
        // Predicated region
        $region45: #{tpu_custom_call.1} parent=43 // pred_check
          %p292 = pneg %p128
        $region46: #{tpu_custom_call.1} parent=43 // pred_check_branch
          %294 = sbr.rel (%p292) target = $region48
        $region47: #{tpu_custom_call.1} parent=43 // pred_region
          %s295 = sand.u32 %s113, 1
          %s296 = scalar_lea.sflag [#allocation4], %s295
          %s297 = sand.u32 %s113, 1
          %s298 = smul.addr %s297, 4
          %s299 = scalar_lea.vmem [#allocation5], %s298
          %301 = dma.done %s296, 64
        $region48: #{tpu_custom_call.1} parent=43 // pred_fallthru
          _
      $region44: #{tpu_custom_call.1} parent=5 // pred_fallthru
        _
    $region6: #{tpu_custom_call.1} parent=1 // loop_footer
      %s19 = sadd.s32 1, %s15
    $region7: #{tpu_custom_call.1} parent=1 // loop_footer_branch
      %14 = sbr.rel target = $region3
    $region8: #{tpu_custom_call.1} parent=1 // loop_exit
      _
    %302 = vsyncpa [#allocation3], 1
    %s303 = scalar_lea.sflag [#allocation3], 1
    %304 = vsyncpa %s303, 1
    %305 = vsyncpa [#allocation4], 1
    %s306 = scalar_lea.sflag [#allocation4], 1
    %307 = vsyncpa %s306, 1

</llo_original>
